<compile_context>
chip_gen: v6e
topology: v6e:2x2x1
jax: 0.10.0
libtpu: 0.0.40
codegen_flags: <defaults>
</compile_context>

<pallas_src>
import jax
import jax.numpy as jnp
from jax import lax
from jax.experimental import pallas as pl
from jax.experimental.pallas import tpu as pltpu


# ----------------------------- kernel factories ----------------------------- #

def _make_sigmoid_direct_kernel(D, tD, need_col_mask):
    """y = sigmoid(x); logdet = sum_last log(sigmoid(x) * (1 - sigmoid(x))).

    Single shared EUP exp:  e = exp(-|x|)
        s       = 1/(1+e)  (x >= 0)   |   e/(1+e)  (x < 0)
        ld_elem = -|x| - 2*log1p(e)   (== log s + log(1-s), finite everywhere)
    Exact divide for s (approx vrcp would violate the 1e-5 y tolerance).
    """
    def kernel(x_ref, y_ref, ld_ref):
        k = pl.program_id(1)
        x = x_ref[...].astype(jnp.float32)
        ax = jnp.abs(x)
        e = jnp.exp(-ax)                       # one EUP exp per element
        inv = 1.0 / (1.0 + e)                  # exact reciprocal
        s = jnp.where(x >= 0, inv, e * inv)
        y_ref[...] = s.astype(y_ref.dtype)
        ld_elem = -ax - 2.0 * jnp.log1p(e)
        if need_col_mask:                      # partial feature block: drop padded lanes
            col = k * tD + lax.broadcasted_iota(jnp.int32, x.shape, x.ndim - 1)
            ld_elem = jnp.where(col < D, ld_elem, 0.0)
        part = jnp.sum(ld_elem, axis=-1, keepdims=True).astype(ld_ref.dtype)

        @pl.when(k == 0)
        def _():
            ld_ref[...] = part                 # first feature tile: store

        @pl.when(k > 0)
        def _():
            ld_ref[...] += part                # later tiles: accumulate (resident block)

    return kernel


def _make_sigmoid_inverse_kernel(D, tD, need_col_mask):
    """y = log(x / (1-x)); logdet = -sum_last log(x - x^2).

    log(x) and log1p(-x) computed once and shared between y and the log-det:
    half the transcendental traffic of the naive form, no division, stable
    near x -> 1.
    """
    def kernel(x_ref, y_ref, ld_ref):
        k = pl.program_id(1)
        x = x_ref[...].astype(jnp.float32)
        lx = jnp.log(x)
        l1mx = jnp.log1p(-x)
        y_ref[...] = (lx - l1mx).astype(y_ref.dtype)
        ld_elem = lx + l1mx
        if need_col_mask:
            col = k * tD + lax.broadcasted_iota(jnp.int32, x.shape, x.ndim - 1)
            ld_elem = jnp.where(col < D, ld_elem, 0.0)
        part = (-jnp.sum(ld_elem, axis=-1, keepdims=True)).astype(ld_ref.dtype)

        @pl.when(k == 0)
        def _():
            ld_ref[...] = part

        @pl.when(k > 0)
        def _():
            ld_ref[...] += part

    return kernel


# ----------------------------- tiling helpers ------------------------------- #

_BLOCK_TARGET_BYTES = 2 << 20   # ~2 MiB per (tb, tD) data block: roofline plateau
_LANE = 128


def _row_granule(itemsize):
    # Min sublane tile: f32 -> 8, bf16 -> 16, int8/fp8 -> 32.
    return max(8, 32 // max(itemsize, 1))


def _pick_tiles(B, D, itemsize):
    """Byte-based tile sizing, independent of D."""
    granule = _row_granule(itemsize)
    rows = _BLOCK_TARGET_BYTES // max(D * itemsize, 1)
    if rows >= B:
        return B, D                                # whole array in one block
    if rows >= granule:
        return (rows // granule) * granule, D      # row-tiled, feature axis whole
    # Very wide feature dim: even `granule` rows overshoot the budget.
    # Tile D as a reduction grid axis (ld output stays resident).
    tb = B if B < granule else granule
    tD = _BLOCK_TARGET_BYTES // max(tb * itemsize, 1)
    tD = min(D, max(_LANE, (tD // _LANE) * _LANE))
    return tb, tD


def _vmem_limit_bytes(tb, tD, itemsize):
    # Double-buffered x + y blocks, lane-padded ld block, plus headroom for
    # Mosaic internal scratch.  Never assume more than v7x's 64 MiB physical.
    data = 2 * (2 * tb * tD * itemsize + tb * _LANE * 4)
    return int(min(max(data + (4 << 20), 24 << 20), 64 << 20))


def _row_axis_semantics():
    # v7x has two TensorCores per chip; only CORE_PARALLEL actually shards a
    # grid axis across them (plain "parallel" does not change codegen).  This
    # kernel is HBM-bandwidth bound, so splitting batch tiles across both TCs
    # is worth up to ~2x on v7x.  v5e/v6e have a single TC: keep PARALLEL.
    try:
        kind = jax.devices()[0].device_kind.lower()
    except Exception:
        kind = ""
    if "v7" in kind or "7x" in kind:
        return pltpu.CORE_PARALLEL
    return pltpu.PARALLEL


# ----------------------------- wrappers ------------------------------------- #

def _run(kernel_factory, x, block_rows=None, block_cols=None):
    if x.ndim != 2:
        # The flow layer reduces over the last axis; flatten leading dims.
        lead = x.shape[:-1]
        y, ld = _run(kernel_factory, x.reshape(-1, x.shape[-1]), block_rows, block_cols)
        return y.reshape(*lead, x.shape[-1]), ld.reshape(*lead, 1)

    B, D = x.shape
    itemsize = x.dtype.itemsize
    granule = _row_granule(itemsize)
    tb, tD = _pick_tiles(B, D, itemsize)
    if block_rows is not None:
        tb = min(int(block_rows), B)
        if tb < B:
            tb = max(granule, (tb // granule) * granule)
    if block_cols is not None:
        tD = min(int(block_cols), D)
        if tD < D:
            tD = max(_LANE, (tD // _LANE) * _LANE)

    need_col_mask = (D % tD) != 0
    kernel = kernel_factory(D, tD, need_col_mask)
    grid = (pl.cdiv(B, tb), pl.cdiv(D, tD))

    cost = pl.CostEstimate(
        flops=8 * B * D,
        transcendentals=2 * B * D,
        bytes_accessed=2 * B * D * itemsize + B * itemsize,
    )

    return pl.pallas_call(
        kernel,
        out_shape=(
            jax.ShapeDtypeStruct((B, D), x.dtype),
            jax.ShapeDtypeStruct((B, 1), x.dtype),
        ),
        grid=grid,
        in_specs=[pl.BlockSpec((tb, tD), lambda i, k: (i, k))],
        out_specs=(
            pl.BlockSpec((tb, tD), lambda i, k: (i, k)),
            pl.BlockSpec((tb, 1), lambda i, k: (i, 0)),   # resident log-det accumulator
        ),
        compiler_params=pltpu.CompilerParams(
            dimension_semantics=(_row_axis_semantics(), pltpu.ARBITRARY),
            vmem_limit_bytes=_vmem_limit_bytes(tb, tD, itemsize),
        ),
        cost_estimate=cost,
    )(x)


def sigmoid_forward(inputs, cond_inputs=None, mode='direct', *,
                    block_rows=None, block_cols=None):
    """JAX/Pallas equivalent of Sigmoid.forward."""
    if mode == 'direct':
        return _run(_make_sigmoid_direct_kernel, inputs, block_rows, block_cols)
    else:
        return _run(_make_sigmoid_inverse_kernel, inputs, block_rows, block_cols)


def logit_forward(inputs, cond_inputs=None, mode='direct', *,
                  block_rows=None, block_cols=None):
    """JAX/Pallas equivalent of Logit.forward (faithful arg forwarding).

    In PyTorch, the string ('inverse'/'direct') lands in the parent's
    cond_inputs, so the parent's mode stays 'direct' and the sigmoid branch
    runs for both modes.  Reproduced here intentionally.
    """
    if mode == 'direct':
        return sigmoid_forward(inputs, 'inverse', block_rows=block_rows, block_cols=block_cols)
    else:
        return sigmoid_forward(inputs, 'direct', block_rows=block_rows, block_cols=block_cols)


# ----------------------------- driver -------------------------------------- #

if __name__ == "__main__":
    key = jax.random.PRNGKey(0)
    batch, hidden = 256, 128  # lane-dense feature dim
    x = jax.random.normal(key, (batch, hidden), dtype=jnp.float32)

    # Default (mode='direct') path, auto tiling (whole array in one block here).
    y, logdet = logit_forward(x)
    jax.block_until_ready((y, logdet))

    # Explicit row tiling to exercise the multi-step pipelined grid (4 tiles of 64 rows).
    y2, logdet2 = logit_forward(x, mode='inverse', block_rows=64)  # same branch by design
    jax.block_until_ready((y2, logdet2))

    # Exercise the Sigmoid inverse kernel directly on (0, 1) inputs.
    u = jax.nn.sigmoid(x)
    yi, ldi = sigmoid_forward(u, mode='inverse', block_rows=64)
    jax.block_until_ready((yi, ldi))

    # Exercise the feature-axis reduction path with partial row AND column
    # blocks (column mask + resident ld accumulator).
    xb = jax.random.normal(jax.random.PRNGKey(1), (40, 320), dtype=jnp.float32)
    yb, ldb = sigmoid_forward(xb, block_rows=16, block_cols=128)
    jax.block_until_ready((yb, ldb))

    # Sanity checks against pure-JAX references (reference math, not the
    # rearranged stable forms).
    s = jax.nn.sigmoid(x)
    ref_y = s
    ref_ld = jnp.sum(jnp.log(s * (1.0 - s)), axis=-1, keepdims=True)
    assert y.shape == (batch, hidden) and logdet.shape == (batch, 1)
    assert jnp.allclose(y, ref_y, atol=1e-5)
    assert jnp.allclose(logdet, ref_ld, atol=1e-3, rtol=1e-4)
    assert jnp.allclose(y2, ref_y, atol=1e-5)
    assert jnp.allclose(logdet2, ref_ld, atol=1e-3, rtol=1e-4)

    ref_yi = jnp.log(u / (1.0 - u))
    ref_ldi = -jnp.sum(jnp.log(u - u * u), axis=-1, keepdims=True)
    assert jnp.allclose(yi, ref_yi, atol=1e-4)
    assert jnp.allclose(ldi, ref_ldi, atol=1e-3, rtol=1e-4)

    sb = jax.nn.sigmoid(xb)
    ref_ldb = jnp.sum(jnp.log(sb * (1.0 - sb)), axis=-1, keepdims=True)
    assert jnp.allclose(yb, sb, atol=1e-5)
    assert jnp.allclose(ldb, ref_ldb, atol=1e-3, rtol=1e-4)

    print("KERNEL_OK")
</pallas_src>

<mosaic_0001>
module attributes {stable_mosaic.version = 11 : i64} {
  func.func @kernel(%arg0: i32, %arg1: i32, %arg2: memref<256x128xf32, #tpu.memory_space<vmem>>, %arg3: memref<256x128xf32, #tpu.memory_space<vmem>>, %arg4: memref<256x1xf32, #tpu.memory_space<vmem>>) attributes {dimension_semantics = [#tpu.dimension_semantics<parallel>, #tpu.dimension_semantics<arbitrary>], iteration_bounds = array<i64: 1, 1>, scalar_prefetch = 0 : i64, scratch_operands = 0 : i64, tpu.core_type = #tpu.core_type<tc>, window_params = [{transform_indices = @transform_0, window_bounds = array<i64: 256, 128>}, {transform_indices = @transform_1, window_bounds = array<i64: 256, 128>}, {transform_indices = @transform_2, window_bounds = array<i64: 256, 1>}]} {
    %c0 = arith.constant 0 : index
    %c0_0 = arith.constant 0 : index
    %0 = vector.load %arg2[%c0, %c0_0] : memref<256x128xf32, #tpu.memory_space<vmem>>, vector<256x128xf32>
    %1 = math.absf %0 : vector<256x128xf32>
    %cst = arith.constant 0.000000e+00 : f32
    %2 = vector.broadcast %cst : f32 to vector<256x128xf32>
    %3 = arith.subf %2, %1 : vector<256x128xf32>
    %4 = math.exp %3 : vector<256x128xf32>
    %cst_1 = arith.constant 1.000000e+00 : f32
    %5 = vector.broadcast %cst_1 : f32 to vector<256x128xf32>
    %6 = arith.addf %5, %4 : vector<256x128xf32>
    %cst_2 = arith.constant 1.000000e+00 : f32
    %7 = vector.broadcast %cst_2 : f32 to vector<256x128xf32>
    %8 = arith.divf %7, %6 : vector<256x128xf32>
    %cst_3 = arith.constant 0.000000e+00 : f32
    %9 = vector.broadcast %cst_3 : f32 to vector<256x128xf32>
    %10 = arith.cmpf oge, %0, %9 : vector<256x128xf32>
    %11 = arith.mulf %4, %8 : vector<256x128xf32>
    %12 = arith.select %10, %8, %11 : vector<256x128xi1>, vector<256x128xf32>
    %c0_4 = arith.constant 0 : index
    %c0_5 = arith.constant 0 : index
    %13 = vector.load %arg3[%c0_4, %c0_5] : memref<256x128xf32, #tpu.memory_space<vmem>>, vector<256x128xf32>
    tpu.vector_store %arg3[%c0_4, %c0_5], %12 {strides = array<i32>} : memref<256x128xf32, #tpu.memory_space<vmem>>, vector<256x128xf32>,
    %cst_6 = arith.constant 0.000000e+00 : f32
    %14 = vector.broadcast %cst_6 : f32 to vector<256x128xf32>
    %15 = arith.subf %14, %1 : vector<256x128xf32>
    %16 = math.log1p %4 : vector<256x128xf32>
    %cst_7 = arith.constant 2.000000e+00 : f32
    %17 = vector.broadcast %cst_7 : f32 to vector<256x128xf32>
    %18 = arith.mulf %17, %16 : vector<256x128xf32>
    %19 = arith.subf %15, %18 : vector<256x128xf32>
    %cst_8 = arith.constant dense<0.000000e+00> : vector<256xf32>
    %20 = vector.multi_reduction <add>, %19, %cst_8 [1] : vector<256x128xf32> to vector<256xf32>
    %21 = vector.shape_cast %20 : vector<256xf32> to vector<256x1xf32>
    %c0_i32 = arith.constant 0 : i32
    %22 = arith.cmpi eq, %arg1, %c0_i32 : i32
    %23 = arith.extui %22 : i1 to i32
    %c0_i32_9 = arith.constant 0 : i32
    %24 = arith.cmpi ne, %23, %c0_i32_9 : i32
    scf.if %24 {
      %c0_12 = arith.constant 0 : index
      %c0_13 = arith.constant 0 : index
      %28 = vector.load %arg4[%c0_12, %c0_13] : memref<256x1xf32, #tpu.memory_space<vmem>>, vector<256x1xf32>
      tpu.vector_store %arg4[%c0_12, %c0_13], %21 {strides = array<i32>} : memref<256x1xf32, #tpu.memory_space<vmem>>, vector<256x1xf32>,
    } else {
    }
    %c0_i32_10 = arith.constant 0 : i32
    %25 = arith.cmpi sgt, %arg1, %c0_i32_10 : i32
    %26 = arith.extui %25 : i1 to i32
    %c0_i32_11 = arith.constant 0 : i32
    %27 = arith.cmpi ne, %26, %c0_i32_11 : i32
    scf.if %27 {
      %c0_12 = arith.constant 0 : index
      %c0_13 = arith.constant 0 : index
      %28 = vector.load %arg4[%c0_12, %c0_13] : memref<256x1xf32, #tpu.memory_space<vmem>>, vector<256x1xf32>
      %29 = arith.addf %28, %21 : vector<256x1xf32>
      %c0_14 = arith.constant 0 : index
      %c0_15 = arith.constant 0 : index
      %30 = vector.load %arg4[%c0_14, %c0_15] : memref<256x1xf32, #tpu.memory_space<vmem>>, vector<256x1xf32>
      tpu.vector_store %arg4[%c0_14, %c0_15], %29 {strides = array<i32>} : memref<256x1xf32, #tpu.memory_space<vmem>>, vector<256x1xf32>,
    } else {
    }
    return
  }
  func.func @transform_0(%arg0: i32, %arg1: i32) -> (i32, i32) {
    %c0_i32 = arith.constant 0 : i32
    return %arg0, %arg1 : i32, i32
  }
  func.func @transform_1(%arg0: i32, %arg1: i32) -> (i32, i32) {
    %c0_i32 = arith.constant 0 : i32
    return %arg0, %arg1 : i32, i32
  }
  func.func @transform_2(%arg0: i32, %arg1: i32) -> (i32, i32) {
    %c0_i32 = arith.constant 0 : i32
    %c0_i32_0 = arith.constant 0 : i32
    return %arg0, %c0_i32 : i32, i32
  }
}

</mosaic_0001>

<llo_original>
// kernel: tpu_custom_call.1
$region0: #{tpu_custom_call.1}
  #allocation0 [shape = 'u32[]', space=smem, size = 0x4, offset = 0x4, fixed_abs, tag = 'smem constant byte address 0x4 - core index']
  #allocation1 [shape = 'u32[144,128]{1,0:T(1,128)}', space=vmem, size = 0x12000, scoped, tag = 'internal scratch']
  %s0 = inlined_call_operand.hbm [shape: f32[256,128], index: 0, kind: input, shape index: {}]
  %s1 = inlined_call_operand.hbm [shape: f32[256,128], index: 1, kind: output, shape index: {0}]
  %s2 = inlined_call_operand.vmem [shape: f32[256,1], index: 2, kind: output, shape index: {1}]
  %3 = xla_tuple %s1, %s2
  %s4 = sld [smem:[#allocation0]]
  $region34: #{tpu_custom_call.1} parent=0
    _
  %s6 = ssub.s32 1, %s4
  %s7 = scalar_select 0, %s6, %s4
  $region1: #{tpu_custom_call.1} parent=0
    #allocation2 [shape = 'u8[131072]{0}', space=vmem, size = 0x20000, scoped, tag = 'input window, operand 0, single buffered']
    #allocation3 [shape = 's32[1]{0}', space=sflag, size = 0x4, scoped, tag = 'scoped memory for tpu_custom_call.1']
    #allocation4 [shape = 's32[1]{0}', space=sflag, size = 0x4, scoped, tag = 'scoped memory for tpu_custom_call.1']
    #allocation5 [shape = 'u8[131072]{0}', space=vmem, size = 0x20000, scoped, tag = 'output window, operand 0, single buffered']
    %8 = vsyncpa [#allocation3], 0
    %9 = vsyncpa [#allocation4], 0
    // Predicated region
    $region2: #{tpu_custom_call.1} parent=1 // pred_check
      _
    $region3: #{tpu_custom_call.1} parent=1 // pred_check_branch
      %11 = sbr.rel (0) target = $region5
    $region4: #{tpu_custom_call.1} parent=1 // pred_region
      %s13 = ssub.s32 4096, 4096
      %14 = vsyncadd [#allocation3], %s13
      %s15 = sshll.u32 [#allocation2], 4
      %s16 = int_to_ptr.vmem [resolvable:$true] %s15
      %21 = dma.hbm_to_vmem [thread:$0]  %s0, 4096, %s16, [#allocation3], 128, 128, 8
    $region5: #{tpu_custom_call.1} parent=1 // pred_fallthru
      _
    // Predicated region
    $region6: #{tpu_custom_call.1} parent=1 // pred_check
      _
    $region7: #{tpu_custom_call.1} parent=1 // pred_check_branch
      %23 = sbr.rel (0) target = $region9
    $region8: #{tpu_custom_call.1} parent=1 // pred_region
      %24 = dma.done [#allocation3], 4096
    $region9: #{tpu_custom_call.1} parent=1 // pred_fallthru
      _
    %v25 = vld [vmem:[#allocation2] sm:$0xff]
    %v26 = vld [vmem:[#allocation2 + $0x8] sm:$0xff]
    %v27 = vld [vmem:[#allocation2 + $0x10] sm:$0xff]
    %v28 = vld [vmem:[#allocation2 + $0x18] sm:$0xff]
    %v29 = vld [vmem:[#allocation2 + $0x20] sm:$0xff]
    %v30 = vld [vmem:[#allocation2 + $0x28] sm:$0xff]
    %v31 = vld [vmem:[#allocation2 + $0x30] sm:$0xff]
    %v32 = vld [vmem:[#allocation2 + $0x38] sm:$0xff]
    %v33 = vld [vmem:[#allocation2 + $0x40] sm:$0xff]
    %v34 = vld [vmem:[#allocation2 + $0x48] sm:$0xff]
    %v35 = vld [vmem:[#allocation2 + $0x50] sm:$0xff]
    %v36 = vld [vmem:[#allocation2 + $0x58] sm:$0xff]
    %v37 = vld [vmem:[#allocation2 + $0x60] sm:$0xff]
    %v38 = vld [vmem:[#allocation2 + $0x68] sm:$0xff]
    %v39 = vld [vmem:[#allocation2 + $0x70] sm:$0xff]
    %v40 = vld [vmem:[#allocation2 + $0x78] sm:$0xff]
    %v41 = vld [vmem:[#allocation2 + $0x80] sm:$0xff]
    %v42 = vld [vmem:[#allocation2 + $0x88] sm:$0xff]
    %v43 = vld [vmem:[#allocation2 + $0x90] sm:$0xff]
    %v44 = vld [vmem:[#allocation2 + $0x98] sm:$0xff]
    %v45 = vld [vmem:[#allocation2 + $0xa0] sm:$0xff]
    %v46 = vld [vmem:[#allocation2 + $0xa8] sm:$0xff]
    %v47 = vld [vmem:[#allocation2 + $0xb0] sm:$0xff]
    %v48 = vld [vmem:[#allocation2 + $0xb8] sm:$0xff]
    %v49 = vld [vmem:[#allocation2 + $0xc0] sm:$0xff]
    %v50 = vld [vmem:[#allocation2 + $0xc8] sm:$0xff]
    %v51 = vld [vmem:[#allocation2 + $0xd0] sm:$0xff]
    %v52 = vld [vmem:[#allocation2 + $0xd8] sm:$0xff]
    %v53 = vld [vmem:[#allocation2 + $0xe0] sm:$0xff]
    %v54 = vld [vmem:[#allocation2 + $0xe8] sm:$0xff]
    %v55 = vld [vmem:[#allocation2 + $0xf0] sm:$0xff]
    %v56 = vld [vmem:[#allocation2 + $0xf8] sm:$0xff]
    %v57 = vand.u32 2147483647, %v25
    %v58 = vand.u32 2147483647, %v26
    %v59 = vand.u32 2147483647, %v27
    %v60 = vand.u32 2147483647, %v28
    %v61 = vand.u32 2147483647, %v29
    %v62 = vand.u32 2147483647, %v30
    %v63 = vand.u32 2147483647, %v31
    %v64 = vand.u32 2147483647, %v32
    %v65 = vand.u32 2147483647, %v33
    %v66 = vand.u32 2147483647, %v34
    %v67 = vand.u32 2147483647, %v35
    %v68 = vand.u32 2147483647, %v36
    %v69 = vand.u32 2147483647, %v37
    %v70 = vand.u32 2147483647, %v38
    %v71 = vand.u32 2147483647, %v39
    %v72 = vand.u32 2147483647, %v40
    %v73 = vand.u32 2147483647, %v41
    %v74 = vand.u32 2147483647, %v42
    %v75 = vand.u32 2147483647, %v43
    %v76 = vand.u32 2147483647, %v44
    %v77 = vand.u32 2147483647, %v45
    %v78 = vand.u32 2147483647, %v46
    %v79 = vand.u32 2147483647, %v47
    %v80 = vand.u32 2147483647, %v48
    %v81 = vand.u32 2147483647, %v49
    %v82 = vand.u32 2147483647, %v50
    %v83 = vand.u32 2147483647, %v51
    %v84 = vand.u32 2147483647, %v52
    %v85 = vand.u32 2147483647, %v53
    %v86 = vand.u32 2147483647, %v54
    %v87 = vand.u32 2147483647, %v55
    %v88 = vand.u32 2147483647, %v56
    %v89 = vsub.f32 0.0, %v57
    %v90 = vsub.f32 0.0, %v58
    %v91 = vsub.f32 0.0, %v59
    %v92 = vsub.f32 0.0, %v60
    %v93 = vsub.f32 0.0, %v61
    %v94 = vsub.f32 0.0, %v62
    %v95 = vsub.f32 0.0, %v63
    %v96 = vsub.f32 0.0, %v64
    %v97 = vsub.f32 0.0, %v65
    %v98 = vsub.f32 0.0, %v66
    %v99 = vsub.f32 0.0, %v67
    %v100 = vsub.f32 0.0, %v68
    %v101 = vsub.f32 0.0, %v69
    %v102 = vsub.f32 0.0, %v70
    %v103 = vsub.f32 0.0, %v71
    %v104 = vsub.f32 0.0, %v72
    %v105 = vsub.f32 0.0, %v73
    %v106 = vsub.f32 0.0, %v74
    %v107 = vsub.f32 0.0, %v75
    %v108 = vsub.f32 0.0, %v76
    %v109 = vsub.f32 0.0, %v77
    %v110 = vsub.f32 0.0, %v78
    %v111 = vsub.f32 0.0, %v79
    %v112 = vsub.f32 0.0, %v80
    %v113 = vsub.f32 0.0, %v81
    %v114 = vsub.f32 0.0, %v82
    %v115 = vsub.f32 0.0, %v83
    %v116 = vsub.f32 0.0, %v84
    %v117 = vsub.f32 0.0, %v85
    %v118 = vsub.f32 0.0, %v86
    %v119 = vsub.f32 0.0, %v87
    %v120 = vsub.f32 0.0, %v88
    %v121 = vmul.f32 %v89, 1.442695
    %v122 = vpow.pop %v121
    %v123 = vmul.f32 %v90, 1.442695
    %v124 = vpow.pop %v123
    %v125 = vmul.f32 %v91, 1.442695
    %v126 = vpow.pop %v125
    %v127 = vmul.f32 %v92, 1.442695
    %v128 = vpow.pop %v127
    %v129 = vmul.f32 %v93, 1.442695
    %v130 = vpow.pop %v129
    %v131 = vmul.f32 %v94, 1.442695
    %v132 = vpow.pop %v131
    %v133 = vmul.f32 %v95, 1.442695
    %v134 = vpow.pop %v133
    %v135 = vmul.f32 %v96, 1.442695
    %v136 = vpow.pop %v135
    %v137 = vmul.f32 %v97, 1.442695
    %v138 = vpow.pop %v137
    %v139 = vmul.f32 %v98, 1.442695
    %v140 = vpow.pop %v139
    %v141 = vmul.f32 %v99, 1.442695
    %v142 = vpow.pop %v141
    %v143 = vmul.f32 %v100, 1.442695
    %v144 = vpow.pop %v143
    %v145 = vmul.f32 %v101, 1.442695
    %v146 = vpow.pop %v145
    %v147 = vmul.f32 %v102, 1.442695
    %v148 = vpow.pop %v147
    %v149 = vmul.f32 %v103, 1.442695
    %v150 = vpow.pop %v149
    %v151 = vmul.f32 %v104, 1.442695
    %v152 = vpow.pop %v151
    %v153 = vmul.f32 %v105, 1.442695
    %v154 = vpow.pop %v153
    %v155 = vmul.f32 %v106, 1.442695
    %v156 = vpow.pop %v155
    %v157 = vmul.f32 %v107, 1.442695
    %v158 = vpow.pop %v157
    %v159 = vmul.f32 %v108, 1.442695
    %v160 = vpow.pop %v159
    %v161 = vmul.f32 %v109, 1.442695
    %v162 = vpow.pop %v161
    %v163 = vmul.f32 %v110, 1.442695
    %v164 = vpow.pop %v163
    %v165 = vmul.f32 %v111, 1.442695
    %v166 = vpow.pop %v165
    %v167 = vmul.f32 %v112, 1.442695
    %v168 = vpow.pop %v167
    %v169 = vmul.f32 %v113, 1.442695
    %v170 = vpow.pop %v169
    %v171 = vmul.f32 %v114, 1.442695
    %v172 = vpow.pop %v171
    %v173 = vmul.f32 %v115, 1.442695
    %v174 = vpow.pop %v173
    %v175 = vmul.f32 %v116, 1.442695
    %v176 = vpow.pop %v175
    %v177 = vmul.f32 %v117, 1.442695
    %v178 = vpow.pop %v177
    %v179 = vmul.f32 %v118, 1.442695
    %v180 = vpow.pop %v179
    %v181 = vmul.f32 %v119, 1.442695
    %v182 = vpow.pop %v181
    %v183 = vmul.f32 %v120, 1.442695
    %v184 = vpow.pop %v183
    %v185 = vadd.f32 %v122, 1.0
    %v186 = vadd.f32 %v124, 1.0
    %v187 = vadd.f32 %v126, 1.0
    %v188 = vadd.f32 %v128, 1.0
    %v189 = vadd.f32 %v130, 1.0
    %v190 = vadd.f32 %v132, 1.0
    %v191 = vadd.f32 %v134, 1.0
    %v192 = vadd.f32 %v136, 1.0
    %v193 = vadd.f32 %v138, 1.0
    %v194 = vadd.f32 %v140, 1.0
    %v195 = vadd.f32 %v142, 1.0
    %v196 = vadd.f32 %v144, 1.0
    %v197 = vadd.f32 %v146, 1.0
    %v198 = vadd.f32 %v148, 1.0
    %v199 = vadd.f32 %v150, 1.0
    %v200 = vadd.f32 %v152, 1.0
    %v201 = vadd.f32 %v154, 1.0
    %v202 = vadd.f32 %v156, 1.0
    %v203 = vadd.f32 %v158, 1.0
    %v204 = vadd.f32 %v160, 1.0
    %v205 = vadd.f32 %v162, 1.0
    %v206 = vadd.f32 %v164, 1.0
    %v207 = vadd.f32 %v166, 1.0
    %v208 = vadd.f32 %v168, 1.0
    %v209 = vadd.f32 %v170, 1.0
    %v210 = vadd.f32 %v172, 1.0
    %v211 = vadd.f32 %v174, 1.0
    %v212 = vadd.f32 %v176, 1.0
    %v213 = vadd.f32 %v178, 1.0
    %v214 = vadd.f32 %v180, 1.0
    %v215 = vadd.f32 %v182, 1.0
    %v216 = vadd.f32 %v184, 1.0
    %v217 = vrcp.pop %v185
    %v218 = vmul.f32 1.0, %v217
    %v219 = vrcp.pop %v186
    %v220 = vmul.f32 1.0, %v219
    %v221 = vrcp.pop %v187
    %v222 = vmul.f32 1.0, %v221
    %v223 = vrcp.pop %v188
    %v224 = vmul.f32 1.0, %v223
    %v225 = vrcp.pop %v189
    %v226 = vmul.f32 1.0, %v225
    %v227 = vrcp.pop %v190
    %v228 = vmul.f32 1.0, %v227
    %v229 = vrcp.pop %v191
    %v230 = vmul.f32 1.0, %v229
    %v231 = vrcp.pop %v192
    %v232 = vmul.f32 1.0, %v231
    %v233 = vrcp.pop %v193
    %v234 = vmul.f32 1.0, %v233
    %v235 = vrcp.pop %v194
    %v236 = vmul.f32 1.0, %v235
    %v237 = vrcp.pop %v195
    %v238 = vmul.f32 1.0, %v237
    %v239 = vrcp.pop %v196
    %v240 = vmul.f32 1.0, %v239
    %v241 = vrcp.pop %v197
    %v242 = vmul.f32 1.0, %v241
    %v243 = vrcp.pop %v198
    %v244 = vmul.f32 1.0, %v243
    %v245 = vrcp.pop %v199
    %v246 = vmul.f32 1.0, %v245
    %v247 = vrcp.pop %v200
    %v248 = vmul.f32 1.0, %v247
    %v249 = vrcp.pop %v201
    %v250 = vmul.f32 1.0, %v249
    %v251 = vrcp.pop %v202
    %v252 = vmul.f32 1.0, %v251
    %v253 = vrcp.pop %v203
    %v254 = vmul.f32 1.0, %v253
    %v255 = vrcp.pop %v204
    %v256 = vmul.f32 1.0, %v255
    %v257 = vrcp.pop %v205
    %v258 = vmul.f32 1.0, %v257
    %v259 = vrcp.pop %v206
    %v260 = vmul.f32 1.0, %v259
    %v261 = vrcp.pop %v207
    %v262 = vmul.f32 1.0, %v261
    %v263 = vrcp.pop %v208
    %v264 = vmul.f32 1.0, %v263
    %v265 = vrcp.pop %v209
    %v266 = vmul.f32 1.0, %v265
    %v267 = vrcp.pop %v210
    %v268 = vmul.f32 1.0, %v267
    %v269 = vrcp.pop %v211
    %v270 = vmul.f32 1.0, %v269
    %v271 = vrcp.pop %v212
    %v272 = vmul.f32 1.0, %v271
    %v273 = vrcp.pop %v213
    %v274 = vmul.f32 1.0, %v273
    %v275 = vrcp.pop %v214
    %v276 = vmul.f32 1.0, %v275
    %v277 = vrcp.pop %v215
    %v278 = vmul.f32 1.0, %v277
    %v279 = vrcp.pop %v216
    %v280 = vmul.f32 1.0, %v279
    %vm281 = vcmp.ge.f32.partialorder %v25, 0.0
    %vm282 = vcmp.ge.f32.partialorder %v26, 0.0
    %vm283 = vcmp.ge.f32.partialorder %v27, 0.0
    %vm284 = vcmp.ge.f32.partialorder %v28, 0.0
    %vm285 = vcmp.ge.f32.partialorder %v29, 0.0
    %vm286 = vcmp.ge.f32.partialorder %v30, 0.0
    %vm287 = vcmp.ge.f32.partialorder %v31, 0.0
    %vm288 = vcmp.ge.f32.partialorder %v32, 0.0
    %vm289 = vcmp.ge.f32.partialorder %v33, 0.0
    %vm290 = vcmp.ge.f32.partialorder %v34, 0.0
    %vm291 = vcmp.ge.f32.partialorder %v35, 0.0
    %vm292 = vcmp.ge.f32.partialorder %v36, 0.0
    %vm293 = vcmp.ge.f32.partialorder %v37, 0.0
    %vm294 = vcmp.ge.f32.partialorder %v38, 0.0
    %vm295 = vcmp.ge.f32.partialorder %v39, 0.0
    %vm296 = vcmp.ge.f32.partialorder %v40, 0.0
    %vm297 = vcmp.ge.f32.partialorder %v41, 0.0
    %vm298 = vcmp.ge.f32.partialorder %v42, 0.0
    %vm299 = vcmp.ge.f32.partialorder %v43, 0.0
    %vm300 = vcmp.ge.f32.partialorder %v44, 0.0
    %vm301 = vcmp.ge.f32.partialorder %v45, 0.0
    %vm302 = vcmp.ge.f32.partialorder %v46, 0.0
    %vm303 = vcmp.ge.f32.partialorder %v47, 0.0
    %vm304 = vcmp.ge.f32.partialorder %v48, 0.0
    %vm305 = vcmp.ge.f32.partialorder %v49, 0.0
    %vm306 = vcmp.ge.f32.partialorder %v50, 0.0
    %vm307 = vcmp.ge.f32.partialorder %v51, 0.0
    %vm308 = vcmp.ge.f32.partialorder %v52, 0.0
    %vm309 = vcmp.ge.f32.partialorder %v53, 0.0
    %vm310 = vcmp.ge.f32.partialorder %v54, 0.0
    %vm311 = vcmp.ge.f32.partialorder %v55, 0.0
    %vm312 = vcmp.ge.f32.partialorder %v56, 0.0
    %v313 = vmul.f32 %v122, %v218
    %v314 = vmul.f32 %v124, %v220
    %v315 = vmul.f32 %v126, %v222
    %v316 = vmul.f32 %v128, %v224
    %v317 = vmul.f32 %v130, %v226
    %v318 = vmul.f32 %v132, %v228
    %v319 = vmul.f32 %v134, %v230
    %v320 = vmul.f32 %v136, %v232
    %v321 = vmul.f32 %v138, %v234
    %v322 = vmul.f32 %v140, %v236
    %v323 = vmul.f32 %v142, %v238
    %v324 = vmul.f32 %v144, %v240
    %v325 = vmul.f32 %v146, %v242
    %v326 = vmul.f32 %v148, %v244
    %v327 = vmul.f32 %v150, %v246
    %v328 = vmul.f32 %v152, %v248
    %v329 = vmul.f32 %v154, %v250
    %v330 = vmul.f32 %v156, %v252
    %v331 = vmul.f32 %v158, %v254
    %v332 = vmul.f32 %v160, %v256
    %v333 = vmul.f32 %v162, %v258
    %v334 = vmul.f32 %v164, %v260
    %v335 = vmul.f32 %v166, %v262
    %v336 = vmul.f32 %v168, %v264
    %v337 = vmul.f32 %v170, %v266
    %v338 = vmul.f32 %v172, %v268
    %v339 = vmul.f32 %v174, %v270
    %v340 = vmul.f32 %v176, %v272
    %v341 = vmul.f32 %v178, %v274
    %v342 = vmul.f32 %v180, %v276
    %v343 = vmul.f32 %v182, %v278
    %v344 = vmul.f32 %v184, %v280
    %v345 = vsel %vm281, %v218, %v313
    %v346 = vsel %vm282, %v220, %v314
    %v347 = vsel %vm283, %v222, %v315
    %v348 = vsel %vm284, %v224, %v316
    %v349 = vsel %vm285, %v226, %v317
    %v350 = vsel %vm286, %v228, %v318
    %v351 = vsel %vm287, %v230, %v319
    %v352 = vsel %vm288, %v232, %v320
    %v353 = vsel %vm289, %v234, %v321
    %v354 = vsel %vm290, %v236, %v322
    %v355 = vsel %vm291, %v238, %v323
    %v356 = vsel %vm292, %v240, %v324
    %v357 = vsel %vm293, %v242, %v325
    %v358 = vsel %vm294, %v244, %v326
    %v359 = vsel %vm295, %v246, %v327
    %v360 = vsel %vm296, %v248, %v328
    %v361 = vsel %vm297, %v250, %v329
    %v362 = vsel %vm298, %v252, %v330
    %v363 = vsel %vm299, %v254, %v331
    %v364 = vsel %vm300, %v256, %v332
    %v365 = vsel %vm301, %v258, %v333
    %v366 = vsel %vm302, %v260, %v334
    %v367 = vsel %vm303, %v262, %v335
    %v368 = vsel %vm304, %v264, %v336
    %v369 = vsel %vm305, %v266, %v337
    %v370 = vsel %vm306, %v268, %v338
    %v371 = vsel %vm307, %v270, %v339
    %v372 = vsel %vm308, %v272, %v340
    %v373 = vsel %vm309, %v274, %v341
    %v374 = vsel %vm310, %v276, %v342
    %v375 = vsel %vm311, %v278, %v343
    %v376 = vsel %vm312, %v280, %v344
    %377 = vst [vmem:[#allocation5] sm:$0xff] %v345
    %378 = vst [vmem:[#allocation5 + $0x8] sm:$0xff] %v346
    %379 = vst [vmem:[#allocation5 + $0x10] sm:$0xff] %v347
    %380 = vst [vmem:[#allocation5 + $0x18] sm:$0xff] %v348
    %381 = vst [vmem:[#allocation5 + $0x20] sm:$0xff] %v349
    %382 = vst [vmem:[#allocation5 + $0x28] sm:$0xff] %v350
    %383 = vst [vmem:[#allocation5 + $0x30] sm:$0xff] %v351
    %384 = vst [vmem:[#allocation5 + $0x38] sm:$0xff] %v352
    %385 = vst [vmem:[#allocation5 + $0x40] sm:$0xff] %v353
    %386 = vst [vmem:[#allocation5 + $0x48] sm:$0xff] %v354
    %387 = vst [vmem:[#allocation5 + $0x50] sm:$0xff] %v355
    %388 = vst [vmem:[#allocation5 + $0x58] sm:$0xff] %v356
    %389 = vst [vmem:[#allocation5 + $0x60] sm:$0xff] %v357
    %390 = vst [vmem:[#allocation5 + $0x68] sm:$0xff] %v358
    %391 = vst [vmem:[#allocation5 + $0x70] sm:$0xff] %v359
    %392 = vst [vmem:[#allocation5 + $0x78] sm:$0xff] %v360
    %393 = vst [vmem:[#allocation5 + $0x80] sm:$0xff] %v361
    %394 = vst [vmem:[#allocation5 + $0x88] sm:$0xff] %v362
    %395 = vst [vmem:[#allocation5 + $0x90] sm:$0xff] %v363
    %396 = vst [vmem:[#allocation5 + $0x98] sm:$0xff] %v364
    %397 = vst [vmem:[#allocation5 + $0xa0] sm:$0xff] %v365
    %398 = vst [vmem:[#allocation5 + $0xa8] sm:$0xff] %v366
    %399 = vst [vmem:[#allocation5 + $0xb0] sm:$0xff] %v367
    %400 = vst [vmem:[#allocation5 + $0xb8] sm:$0xff] %v368
    %401 = vst [vmem:[#allocation5 + $0xc0] sm:$0xff] %v369
    %402 = vst [vmem:[#allocation5 + $0xc8] sm:$0xff] %v370
    %403 = vst [vmem:[#allocation5 + $0xd0] sm:$0xff] %v371
    %404 = vst [vmem:[#allocation5 + $0xd8] sm:$0xff] %v372
    %405 = vst [vmem:[#allocation5 + $0xe0] sm:$0xff] %v373
    %406 = vst [vmem:[#allocation5 + $0xe8] sm:$0xff] %v374
    %407 = vst [vmem:[#allocation5 + $0xf0] sm:$0xff] %v375
    %408 = vst [vmem:[#allocation5 + $0xf8] sm:$0xff] %v376
    %v409 = vadd.f32 %v122, 1.0
    %v410 = vlog2.pop %v409
    %v411 = vmul.f32 %v410, 0.6931472
    %v412 = vmul.f32 -0.5, %v122
    %v413 = vadd.f32 %v412, 1.0
    %v414 = vmul.f32 %v413, %v122
    %v415 = vand.u32 2147483647, %v122
    %vm416 = vcmp.lt.f32.partialorder %v415, 0.0004427343
    %v417 = vsel %vm416, %v414, %v411
    %v418 = vadd.f32 %v124, 1.0
    %v419 = vlog2.pop %v418
    %v420 = vmul.f32 %v419, 0.6931472
    %v421 = vmul.f32 -0.5, %v124
    %v422 = vadd.f32 %v421, 1.0
    %v423 = vmul.f32 %v422, %v124
    %v424 = vand.u32 2147483647, %v124
    %vm425 = vcmp.lt.f32.partialorder %v424, 0.0004427343
    %v426 = vsel %vm425, %v423, %v420
    %v427 = vadd.f32 %v126, 1.0
    %v428 = vlog2.pop %v427
    %v429 = vmul.f32 %v428, 0.6931472
    %v430 = vmul.f32 -0.5, %v126
    %v431 = vadd.f32 %v430, 1.0
    %v432 = vmul.f32 %v431, %v126
    %v433 = vand.u32 2147483647, %v126
    %vm434 = vcmp.lt.f32.partialorder %v433, 0.0004427343
    %v435 = vsel %vm434, %v432, %v429
    %v436 = vadd.f32 %v128, 1.0
    %v437 = vlog2.pop %v436
    %v438 = vmul.f32 %v437, 0.6931472
    %v439 = vmul.f32 -0.5, %v128
    %v440 = vadd.f32 %v439, 1.0
    %v441 = vmul.f32 %v440, %v128
    %v442 = vand.u32 2147483647, %v128
    %vm443 = vcmp.lt.f32.partialorder %v442, 0.0004427343
    %v444 = vsel %vm443, %v441, %v438
    %v445 = vadd.f32 %v130, 1.0
    %v446 = vlog2.pop %v445
    %v447 = vmul.f32 %v446, 0.6931472
    %v448 = vmul.f32 -0.5, %v130
    %v449 = vadd.f32 %v448, 1.0
    %v450 = vmul.f32 %v449, %v130
    %v451 = vand.u32 2147483647, %v130
    %vm452 = vcmp.lt.f32.partialorder %v451, 0.0004427343
    %v453 = vsel %vm452, %v450, %v447
    %v454 = vadd.f32 %v132, 1.0
    %v455 = vlog2.pop %v454
    %v456 = vmul.f32 %v455, 0.6931472
    %v457 = vmul.f32 -0.5, %v132
    %v458 = vadd.f32 %v457, 1.0
    %v459 = vmul.f32 %v458, %v132
    %v460 = vand.u32 2147483647, %v132
    %vm461 = vcmp.lt.f32.partialorder %v460, 0.0004427343
    %v462 = vsel %vm461, %v459, %v456
    %v463 = vadd.f32 %v134, 1.0
    %v464 = vlog2.pop %v463
    %v465 = vmul.f32 %v464, 0.6931472
    %v466 = vmul.f32 -0.5, %v134
    %v467 = vadd.f32 %v466, 1.0
    %v468 = vmul.f32 %v467, %v134
    %v469 = vand.u32 2147483647, %v134
    %vm470 = vcmp.lt.f32.partialorder %v469, 0.0004427343
    %v471 = vsel %vm470, %v468, %v465
    %v472 = vadd.f32 %v136, 1.0
    %v473 = vlog2.pop %v472
    %v474 = vmul.f32 %v473, 0.6931472
    %v475 = vmul.f32 -0.5, %v136
    %v476 = vadd.f32 %v475, 1.0
    %v477 = vmul.f32 %v476, %v136
    %v478 = vand.u32 2147483647, %v136
    %vm479 = vcmp.lt.f32.partialorder %v478, 0.0004427343
    %v480 = vsel %vm479, %v477, %v474
    %v481 = vadd.f32 %v138, 1.0
    %v482 = vlog2.pop %v481
    %v483 = vmul.f32 %v482, 0.6931472
    %v484 = vmul.f32 -0.5, %v138
    %v485 = vadd.f32 %v484, 1.0
    %v486 = vmul.f32 %v485, %v138
    %v487 = vand.u32 2147483647, %v138
    %vm488 = vcmp.lt.f32.partialorder %v487, 0.0004427343
    %v489 = vsel %vm488, %v486, %v483
    %v490 = vadd.f32 %v140, 1.0
    %v491 = vlog2.pop %v490
    %v492 = vmul.f32 %v491, 0.6931472
    %v493 = vmul.f32 -0.5, %v140
    %v494 = vadd.f32 %v493, 1.0
    %v495 = vmul.f32 %v494, %v140
    %v496 = vand.u32 2147483647, %v140
    %vm497 = vcmp.lt.f32.partialorder %v496, 0.0004427343
    %v498 = vsel %vm497, %v495, %v492
    %v499 = vadd.f32 %v142, 1.0
    %v500 = vlog2.pop %v499
    %v501 = vmul.f32 %v500, 0.6931472
    %v502 = vmul.f32 -0.5, %v142
    %v503 = vadd.f32 %v502, 1.0
    %v504 = vmul.f32 %v503, %v142
    %v505 = vand.u32 2147483647, %v142
    %vm506 = vcmp.lt.f32.partialorder %v505, 0.0004427343
    %v507 = vsel %vm506, %v504, %v501
    %v508 = vadd.f32 %v144, 1.0
    %v509 = vlog2.pop %v508
    %v510 = vmul.f32 %v509, 0.6931472
    %v511 = vmul.f32 -0.5, %v144
    %v512 = vadd.f32 %v511, 1.0
    %v513 = vmul.f32 %v512, %v144
    %v514 = vand.u32 2147483647, %v144
    %vm515 = vcmp.lt.f32.partialorder %v514, 0.0004427343
    %v516 = vsel %vm515, %v513, %v510
    %v517 = vadd.f32 %v146, 1.0
    %v518 = vlog2.pop %v517
    %v519 = vmul.f32 %v518, 0.6931472
    %v520 = vmul.f32 -0.5, %v146
    %v521 = vadd.f32 %v520, 1.0
    %v522 = vmul.f32 %v521, %v146
    %v523 = vand.u32 2147483647, %v146
    %vm524 = vcmp.lt.f32.partialorder %v523, 0.0004427343
    %v525 = vsel %vm524, %v522, %v519
    %v526 = vadd.f32 %v148, 1.0
    %v527 = vlog2.pop %v526
    %v528 = vmul.f32 %v527, 0.6931472
    %v529 = vmul.f32 -0.5, %v148
    %v530 = vadd.f32 %v529, 1.0
    %v531 = vmul.f32 %v530, %v148
    %v532 = vand.u32 2147483647, %v148
    %vm533 = vcmp.lt.f32.partialorder %v532, 0.0004427343
    %v534 = vsel %vm533, %v531, %v528
    %v535 = vadd.f32 %v150, 1.0
    %v536 = vlog2.pop %v535
    %v537 = vmul.f32 %v536, 0.6931472
    %v538 = vmul.f32 -0.5, %v150
    %v539 = vadd.f32 %v538, 1.0
    %v540 = vmul.f32 %v539, %v150
    %v541 = vand.u32 2147483647, %v150
    %vm542 = vcmp.lt.f32.partialorder %v541, 0.0004427343
    %v543 = vsel %vm542, %v540, %v537
    %v544 = vadd.f32 %v152, 1.0
    %v545 = vlog2.pop %v544
    %v546 = vmul.f32 %v545, 0.6931472
    %v547 = vmul.f32 -0.5, %v152
    %v548 = vadd.f32 %v547, 1.0
    %v549 = vmul.f32 %v548, %v152
    %v550 = vand.u32 2147483647, %v152
    %vm551 = vcmp.lt.f32.partialorder %v550, 0.0004427343
    %v552 = vsel %vm551, %v549, %v546
    %v553 = vadd.f32 %v154, 1.0
    %v554 = vlog2.pop %v553
    %v555 = vmul.f32 %v554, 0.6931472
    %v556 = vmul.f32 -0.5, %v154
    %v557 = vadd.f32 %v556, 1.0
    %v558 = vmul.f32 %v557, %v154
    %v559 = vand.u32 2147483647, %v154
    %vm560 = vcmp.lt.f32.partialorder %v559, 0.0004427343
    %v561 = vsel %vm560, %v558, %v555
    %v562 = vadd.f32 %v156, 1.0
    %v563 = vlog2.pop %v562
    %v564 = vmul.f32 %v563, 0.6931472
    %v565 = vmul.f32 -0.5, %v156
    %v566 = vadd.f32 %v565, 1.0
    %v567 = vmul.f32 %v566, %v156
    %v568 = vand.u32 2147483647, %v156
    %vm569 = vcmp.lt.f32.partialorder %v568, 0.0004427343
    %v570 = vsel %vm569, %v567, %v564
    %v571 = vadd.f32 %v158, 1.0
    %v572 = vlog2.pop %v571
    %v573 = vmul.f32 %v572, 0.6931472
    %v574 = vmul.f32 -0.5, %v158
    %v575 = vadd.f32 %v574, 1.0
    %v576 = vmul.f32 %v575, %v158
    %v577 = vand.u32 2147483647, %v158
    %vm578 = vcmp.lt.f32.partialorder %v577, 0.0004427343
    %v579 = vsel %vm578, %v576, %v573
    %v580 = vadd.f32 %v160, 1.0
    %v581 = vlog2.pop %v580
    %v582 = vmul.f32 %v581, 0.6931472
    %v583 = vmul.f32 -0.5, %v160
    %v584 = vadd.f32 %v583, 1.0
    %v585 = vmul.f32 %v584, %v160
    %v586 = vand.u32 2147483647, %v160
    %vm587 = vcmp.lt.f32.partialorder %v586, 0.0004427343
    %v588 = vsel %vm587, %v585, %v582
    %v589 = vadd.f32 %v162, 1.0
    %v590 = vlog2.pop %v589
    %v591 = vmul.f32 %v590, 0.6931472
    %v592 = vmul.f32 -0.5, %v162
    %v593 = vadd.f32 %v592, 1.0
    %v594 = vmul.f32 %v593, %v162
    %v595 = vand.u32 2147483647, %v162
    %vm596 = vcmp.lt.f32.partialorder %v595, 0.0004427343
    %v597 = vsel %vm596, %v594, %v591
    %v598 = vadd.f32 %v164, 1.0
    %v599 = vlog2.pop %v598
    %v600 = vmul.f32 %v599, 0.6931472
    %v601 = vmul.f32 -0.5, %v164
    %v602 = vadd.f32 %v601, 1.0
    %v603 = vmul.f32 %v602, %v164
    %v604 = vand.u32 2147483647, %v164
    %vm605 = vcmp.lt.f32.partialorder %v604, 0.0004427343
    %v606 = vsel %vm605, %v603, %v600
    %v607 = vadd.f32 %v166, 1.0
    %v608 = vlog2.pop %v607
    %v609 = vmul.f32 %v608, 0.6931472
    %v610 = vmul.f32 -0.5, %v166
    %v611 = vadd.f32 %v610, 1.0
    %v612 = vmul.f32 %v611, %v166
    %v613 = vand.u32 2147483647, %v166
    %vm614 = vcmp.lt.f32.partialorder %v613, 0.0004427343
    %v615 = vsel %vm614, %v612, %v609
    %v616 = vadd.f32 %v168, 1.0
    %v617 = vlog2.pop %v616
    %v618 = vmul.f32 %v617, 0.6931472
    %v619 = vmul.f32 -0.5, %v168
    %v620 = vadd.f32 %v619, 1.0
    %v621 = vmul.f32 %v620, %v168
    %v622 = vand.u32 2147483647, %v168
    %vm623 = vcmp.lt.f32.partialorder %v622, 0.0004427343
    %v624 = vsel %vm623, %v621, %v618
    %v625 = vadd.f32 %v170, 1.0
    %v626 = vlog2.pop %v625
    %v627 = vmul.f32 %v626, 0.6931472
    %v628 = vmul.f32 -0.5, %v170
    %v629 = vadd.f32 %v628, 1.0
    %v630 = vmul.f32 %v629, %v170
    %v631 = vand.u32 2147483647, %v170
    %vm632 = vcmp.lt.f32.partialorder %v631, 0.0004427343
    %v633 = vsel %vm632, %v630, %v627
    %v634 = vadd.f32 %v172, 1.0
    %v635 = vlog2.pop %v634
    %v636 = vmul.f32 %v635, 0.6931472
    %v637 = vmul.f32 -0.5, %v172
    %v638 = vadd.f32 %v637, 1.0
    %v639 = vmul.f32 %v638, %v172
    %v640 = vand.u32 2147483647, %v172
    %vm641 = vcmp.lt.f32.partialorder %v640, 0.0004427343
    %v642 = vsel %vm641, %v639, %v636
    %v643 = vadd.f32 %v174, 1.0
    %v644 = vlog2.pop %v643
    %v645 = vmul.f32 %v644, 0.6931472
    %v646 = vmul.f32 -0.5, %v174
    %v647 = vadd.f32 %v646, 1.0
    %v648 = vmul.f32 %v647, %v174
    %v649 = vand.u32 2147483647, %v174
    %vm650 = vcmp.lt.f32.partialorder %v649, 0.0004427343
    %v651 = vsel %vm650, %v648, %v645
    %v652 = vadd.f32 %v176, 1.0
    %v653 = vlog2.pop %v652
    %v654 = vmul.f32 %v653, 0.6931472
    %v655 = vmul.f32 -0.5, %v176
    %v656 = vadd.f32 %v655, 1.0
    %v657 = vmul.f32 %v656, %v176
    %v658 = vand.u32 2147483647, %v176
    %vm659 = vcmp.lt.f32.partialorder %v658, 0.0004427343
    %v660 = vsel %vm659, %v657, %v654
    %v661 = vadd.f32 %v178, 1.0
    %v662 = vlog2.pop %v661
    %v663 = vmul.f32 %v662, 0.6931472
    %v664 = vmul.f32 -0.5, %v178
    %v665 = vadd.f32 %v664, 1.0
    %v666 = vmul.f32 %v665, %v178
    %v667 = vand.u32 2147483647, %v178
    %vm668 = vcmp.lt.f32.partialorder %v667, 0.0004427343
    %v669 = vsel %vm668, %v666, %v663
    %v670 = vadd.f32 %v180, 1.0
    %v671 = vlog2.pop %v670
    %v672 = vmul.f32 %v671, 0.6931472
    %v673 = vmul.f32 -0.5, %v180
    %v674 = vadd.f32 %v673, 1.0
    %v675 = vmul.f32 %v674, %v180
    %v676 = vand.u32 2147483647, %v180
    %vm677 = vcmp.lt.f32.partialorder %v676, 0.0004427343
    %v678 = vsel %vm677, %v675, %v672
    %v679 = vadd.f32 %v182, 1.0
    %v680 = vlog2.pop %v679
    %v681 = vmul.f32 %v680, 0.6931472
    %v682 = vmul.f32 -0.5, %v182
    %v683 = vadd.f32 %v682, 1.0
    %v684 = vmul.f32 %v683, %v182
    %v685 = vand.u32 2147483647, %v182
    %vm686 = vcmp.lt.f32.partialorder %v685, 0.0004427343
    %v687 = vsel %vm686, %v684, %v681
    %v688 = vadd.f32 %v184, 1.0
    %v689 = vlog2.pop %v688
    %v690 = vmul.f32 %v689, 0.6931472
    %v691 = vmul.f32 -0.5, %v184
    %v692 = vadd.f32 %v691, 1.0
    %v693 = vmul.f32 %v692, %v184
    %v694 = vand.u32 2147483647, %v184
    %vm695 = vcmp.lt.f32.partialorder %v694, 0.0004427343
    %v696 = vsel %vm695, %v693, %v690
    %v697 = vmul.f32 %v417, 2.0
    %v698 = vmul.f32 %v426, 2.0
    %v699 = vmul.f32 %v435, 2.0
    %v700 = vmul.f32 %v444, 2.0
    %v701 = vmul.f32 %v453, 2.0
    %v702 = vmul.f32 %v462, 2.0
    %v703 = vmul.f32 %v471, 2.0
    %v704 = vmul.f32 %v480, 2.0
    %v705 = vmul.f32 %v489, 2.0
    %v706 = vmul.f32 %v498, 2.0
    %v707 = vmul.f32 %v507, 2.0
    %v708 = vmul.f32 %v516, 2.0
    %v709 = vmul.f32 %v525, 2.0
    %v710 = vmul.f32 %v534, 2.0
    %v711 = vmul.f32 %v543, 2.0
    %v712 = vmul.f32 %v552, 2.0
    %v713 = vmul.f32 %v561, 2.0
    %v714 = vmul.f32 %v570, 2.0
    %v715 = vmul.f32 %v579, 2.0
    %v716 = vmul.f32 %v588, 2.0
    %v717 = vmul.f32 %v597, 2.0
    %v718 = vmul.f32 %v606, 2.0
    %v719 = vmul.f32 %v615, 2.0
    %v720 = vmul.f32 %v624, 2.0
    %v721 = vmul.f32 %v633, 2.0
    %v722 = vmul.f32 %v642, 2.0
    %v723 = vmul.f32 %v651, 2.0
    %v724 = vmul.f32 %v660, 2.0
    %v725 = vmul.f32 %v669, 2.0
    %v726 = vmul.f32 %v678, 2.0
    %v727 = vmul.f32 %v687, 2.0
    %v728 = vmul.f32 %v696, 2.0
    %v729 = vsub.f32 %v89, %v697
    %v730 = vsub.f32 %v90, %v698
    %v731 = vsub.f32 %v91, %v699
    %v732 = vsub.f32 %v92, %v700
    %v733 = vsub.f32 %v93, %v701
    %v734 = vsub.f32 %v94, %v702
    %v735 = vsub.f32 %v95, %v703
    %v736 = vsub.f32 %v96, %v704
    %v737 = vsub.f32 %v97, %v705
    %v738 = vsub.f32 %v98, %v706
    %v739 = vsub.f32 %v99, %v707
    %v740 = vsub.f32 %v100, %v708
    %v741 = vsub.f32 %v101, %v709
    %v742 = vsub.f32 %v102, %v710
    %v743 = vsub.f32 %v103, %v711
    %v744 = vsub.f32 %v104, %v712
    %v745 = vsub.f32 %v105, %v713
    %v746 = vsub.f32 %v106, %v714
    %v747 = vsub.f32 %v107, %v715
    %v748 = vsub.f32 %v108, %v716
    %v749 = vsub.f32 %v109, %v717
    %v750 = vsub.f32 %v110, %v718
    %v751 = vsub.f32 %v111, %v719
    %v752 = vsub.f32 %v112, %v720
    %v753 = vsub.f32 %v113, %v721
    %v754 = vsub.f32 %v114, %v722
    %v755 = vsub.f32 %v115, %v723
    %v756 = vsub.f32 %v116, %v724
    %v757 = vsub.f32 %v117, %v725
    %v758 = vsub.f32 %v118, %v726
    %v759 = vsub.f32 %v119, %v727
    %v760 = vsub.f32 %v120, %v728
    %761 = vadd.xlane.f32.xlu0 %v729
    %v762 = vpop.xlane.xlu0 %761
    %763 = vadd.xlane.f32.xlu0 %v730
    %v764 = vpop.xlane.xlu0 %763
    %765 = vadd.xlane.f32.xlu0 %v731
    %v766 = vpop.xlane.xlu0 %765
    %767 = vadd.xlane.f32.xlu0 %v732
    %v768 = vpop.xlane.xlu0 %767
    %769 = vadd.xlane.f32.xlu0 %v733
    %v770 = vpop.xlane.xlu0 %769
    %771 = vadd.xlane.f32.xlu0 %v734
    %v772 = vpop.xlane.xlu0 %771
    %773 = vadd.xlane.f32.xlu0 %v735
    %v774 = vpop.xlane.xlu0 %773
    %775 = vadd.xlane.f32.xlu0 %v736
    %v776 = vpop.xlane.xlu0 %775
    %777 = vadd.xlane.f32.xlu0 %v737
    %v778 = vpop.xlane.xlu0 %777
    %779 = vadd.xlane.f32.xlu0 %v738
    %v780 = vpop.xlane.xlu0 %779
    %781 = vadd.xlane.f32.xlu0 %v739
    %v782 = vpop.xlane.xlu0 %781
    %783 = vadd.xlane.f32.xlu0 %v740
    %v784 = vpop.xlane.xlu0 %783
    %785 = vadd.xlane.f32.xlu0 %v741
    %v786 = vpop.xlane.xlu0 %785
    %787 = vadd.xlane.f32.xlu0 %v742
    %v788 = vpop.xlane.xlu0 %787
    %789 = vadd.xlane.f32.xlu0 %v743
    %v790 = vpop.xlane.xlu0 %789
    %791 = vadd.xlane.f32.xlu0 %v744
    %v792 = vpop.xlane.xlu0 %791
    %793 = vadd.xlane.f32.xlu0 %v745
    %v794 = vpop.xlane.xlu0 %793
    %795 = vadd.xlane.f32.xlu0 %v746
    %v796 = vpop.xlane.xlu0 %795
    %797 = vadd.xlane.f32.xlu0 %v747
    %v798 = vpop.xlane.xlu0 %797
    %799 = vadd.xlane.f32.xlu0 %v748
    %v800 = vpop.xlane.xlu0 %799
    %801 = vadd.xlane.f32.xlu0 %v749
    %v802 = vpop.xlane.xlu0 %801
    %803 = vadd.xlane.f32.xlu0 %v750
    %v804 = vpop.xlane.xlu0 %803
    %805 = vadd.xlane.f32.xlu0 %v751
    %v806 = vpop.xlane.xlu0 %805
    %807 = vadd.xlane.f32.xlu0 %v752
    %v808 = vpop.xlane.xlu0 %807
    %809 = vadd.xlane.f32.xlu0 %v753
    %v810 = vpop.xlane.xlu0 %809
    %811 = vadd.xlane.f32.xlu0 %v754
    %v812 = vpop.xlane.xlu0 %811
    %813 = vadd.xlane.f32.xlu0 %v755
    %v814 = vpop.xlane.xlu0 %813
    %815 = vadd.xlane.f32.xlu0 %v756
    %v816 = vpop.xlane.xlu0 %815
    %817 = vadd.xlane.f32.xlu0 %v757
    %v818 = vpop.xlane.xlu0 %817
    %819 = vadd.xlane.f32.xlu0 %v758
    %v820 = vpop.xlane.xlu0 %819
    %821 = vadd.xlane.f32.xlu0 %v759
    %v822 = vpop.xlane.xlu0 %821
    %823 = vadd.xlane.f32.xlu0 %v760
    %v824 = vpop.xlane.xlu0 %823
    %p825 = scmp.eq.s32.totalorder 0, 0
    // Predicated region
    $region10: #{tpu_custom_call.1} parent=1 // pred_check
      %p826 = pneg %p825
    $region11: #{tpu_custom_call.1} parent=1 // pred_check_branch
      %828 = sbr.rel (%p826) target = $region13
    $region12: #{tpu_custom_call.1} parent=1 // pred_region
      %vm829 = vcmask 7168
      %830 = vst.msk [vmem:[%s2] sm:$0xff] %vm829, %v762
      %831 = vst.msk [vmem:[%s2 + $0x8] sm:$0xff] %vm829, %v764
      %832 = vst.msk [vmem:[%s2 + $0x10] sm:$0xff] %vm829, %v766
      %833 = vst.msk [vmem:[%s2 + $0x18] sm:$0xff] %vm829, %v768
      %834 = vst.msk [vmem:[%s2 + $0x20] sm:$0xff] %vm829, %v770
      %835 = vst.msk [vmem:[%s2 + $0x28] sm:$0xff] %vm829, %v772
      %836 = vst.msk [vmem:[%s2 + $0x30] sm:$0xff] %vm829, %v774
      %837 = vst.msk [vmem:[%s2 + $0x38] sm:$0xff] %vm829, %v776
      %838 = vst.msk [vmem:[%s2 + $0x40] sm:$0xff] %vm829, %v778
      %839 = vst.msk [vmem:[%s2 + $0x48] sm:$0xff] %vm829, %v780
      %840 = vst.msk [vmem:[%s2 + $0x50] sm:$0xff] %vm829, %v782
      %841 = vst.msk [vmem:[%s2 + $0x58] sm:$0xff] %vm829, %v784
      %842 = vst.msk [vmem:[%s2 + $0x60] sm:$0xff] %vm829, %v786
      %843 = vst.msk [vmem:[%s2 + $0x68] sm:$0xff] %vm829, %v788
      %844 = vst.msk [vmem:[%s2 + $0x70] sm:$0xff] %vm829, %v790
      %845 = vst.msk [vmem:[%s2 + $0x78] sm:$0xff] %vm829, %v792
      %846 = vst.msk [vmem:[%s2 + $0x80] sm:$0xff] %vm829, %v794
      %847 = vst.msk [vmem:[%s2 + $0x88] sm:$0xff] %vm829, %v796
      %848 = vst.msk [vmem:[%s2 + $0x90] sm:$0xff] %vm829, %v798
      %849 = vst.msk [vmem:[%s2 + $0x98] sm:$0xff] %vm829, %v800
      %850 = vst.msk [vmem:[%s2 + $0xa0] sm:$0xff] %vm829, %v802
      %851 = vst.msk [vmem:[%s2 + $0xa8] sm:$0xff] %vm829, %v804
      %852 = vst.msk [vmem:[%s2 + $0xb0] sm:$0xff] %vm829, %v806
      %853 = vst.msk [vmem:[%s2 + $0xb8] sm:$0xff] %vm829, %v808
      %854 = vst.msk [vmem:[%s2 + $0xc0] sm:$0xff] %vm829, %v810
      %855 = vst.msk [vmem:[%s2 + $0xc8] sm:$0xff] %vm829, %v812
      %856 = vst.msk [vmem:[%s2 + $0xd0] sm:$0xff] %vm829, %v814
      %857 = vst.msk [vmem:[%s2 + $0xd8] sm:$0xff] %vm829, %v816
      %858 = vst.msk [vmem:[%s2 + $0xe0] sm:$0xff] %vm829, %v818
      %859 = vst.msk [vmem:[%s2 + $0xe8] sm:$0xff] %vm829, %v820
      %860 = vst.msk [vmem:[%s2 + $0xf0] sm:$0xff] %vm829, %v822
      %861 = vst.msk [vmem:[%s2 + $0xf8] sm:$0xff] %vm829, %v824
    $region13: #{tpu_custom_call.1} parent=1 // pred_fallthru
      _
    %p862 = scmp.gt.s32.totalorder 0, 0
    // Predicated region
    $region14: #{tpu_custom_call.1} parent=1 // pred_check
      %p863 = pneg %p862
    $region15: #{tpu_custom_call.1} parent=1 // pred_check_branch
      %865 = sbr.rel (%p863) target = $region17
    $region16: #{tpu_custom_call.1} parent=1 // pred_region
      %v866 = vld [vmem:[%s2] sm:$0xff]
      %v867 = vld [vmem:[%s2 + $0x8] sm:$0xff]
      %v868 = vld [vmem:[%s2 + $0x10] sm:$0xff]
      %v869 = vld [vmem:[%s2 + $0x18] sm:$0xff]
      %v870 = vld [vmem:[%s2 + $0x20] sm:$0xff]
      %v871 = vld [vmem:[%s2 + $0x28] sm:$0xff]
      %v872 = vld [vmem:[%s2 + $0x30] sm:$0xff]
      %v873 = vld [vmem:[%s2 + $0x38] sm:$0xff]
      %v874 = vld [vmem:[%s2 + $0x40] sm:$0xff]
      %v875 = vld [vmem:[%s2 + $0x48] sm:$0xff]
      %v876 = vld [vmem:[%s2 + $0x50] sm:$0xff]
      %v877 = vld [vmem:[%s2 + $0x58] sm:$0xff]
      %v878 = vld [vmem:[%s2 + $0x60] sm:$0xff]
      %v879 = vld [vmem:[%s2 + $0x68] sm:$0xff]
      %v880 = vld [vmem:[%s2 + $0x70] sm:$0xff]
      %v881 = vld [vmem:[%s2 + $0x78] sm:$0xff]
      %v882 = vld [vmem:[%s2 + $0x80] sm:$0xff]
      %v883 = vld [vmem:[%s2 + $0x88] sm:$0xff]
      %v884 = vld [vmem:[%s2 + $0x90] sm:$0xff]
      %v885 = vld [vmem:[%s2 + $0x98] sm:$0xff]
      %v886 = vld [vmem:[%s2 + $0xa0] sm:$0xff]
      %v887 = vld [vmem:[%s2 + $0xa8] sm:$0xff]
      %v888 = vld [vmem:[%s2 + $0xb0] sm:$0xff]
      %v889 = vld [vmem:[%s2 + $0xb8] sm:$0xff]
      %v890 = vld [vmem:[%s2 + $0xc0] sm:$0xff]
      %v891 = vld [vmem:[%s2 + $0xc8] sm:$0xff]
      %v892 = vld [vmem:[%s2 + $0xd0] sm:$0xff]
      %v893 = vld [vmem:[%s2 + $0xd8] sm:$0xff]
      %v894 = vld [vmem:[%s2 + $0xe0] sm:$0xff]
      %v895 = vld [vmem:[%s2 + $0xe8] sm:$0xff]
      %v896 = vld [vmem:[%s2 + $0xf0] sm:$0xff]
      %v897 = vld [vmem:[%s2 + $0xf8] sm:$0xff]
      %v898 = vadd.f32 %v866, %v762
      %v899 = vadd.f32 %v867, %v764
      %v900 = vadd.f32 %v868, %v766
      %v901 = vadd.f32 %v869, %v768
      %v902 = vadd.f32 %v870, %v770
      %v903 = vadd.f32 %v871, %v772
      %v904 = vadd.f32 %v872, %v774
      %v905 = vadd.f32 %v873, %v776
      %v906 = vadd.f32 %v874, %v778
      %v907 = vadd.f32 %v875, %v780
      %v908 = vadd.f32 %v876, %v782
      %v909 = vadd.f32 %v877, %v784
      %v910 = vadd.f32 %v878, %v786
      %v911 = vadd.f32 %v879, %v788
      %v912 = vadd.f32 %v880, %v790
      %v913 = vadd.f32 %v881, %v792
      %v914 = vadd.f32 %v882, %v794
      %v915 = vadd.f32 %v883, %v796
      %v916 = vadd.f32 %v884, %v798
      %v917 = vadd.f32 %v885, %v800
      %v918 = vadd.f32 %v886, %v802
      %v919 = vadd.f32 %v887, %v804
      %v920 = vadd.f32 %v888, %v806
      %v921 = vadd.f32 %v889, %v808
      %v922 = vadd.f32 %v890, %v810
      %v923 = vadd.f32 %v891, %v812
      %v924 = vadd.f32 %v892, %v814
      %v925 = vadd.f32 %v893, %v816
      %v926 = vadd.f32 %v894, %v818
      %v927 = vadd.f32 %v895, %v820
      %v928 = vadd.f32 %v896, %v822
      %v929 = vadd.f32 %v897, %v824
      %vm930 = vcmask 7168
      %931 = vst.msk [vmem:[%s2] sm:$0xff] %vm930, %v898
      %932 = vst.msk [vmem:[%s2 + $0x8] sm:$0xff] %vm930, %v899
      %933 = vst.msk [vmem:[%s2 + $0x10] sm:$0xff] %vm930, %v900
      %934 = vst.msk [vmem:[%s2 + $0x18] sm:$0xff] %vm930, %v901
      %935 = vst.msk [vmem:[%s2 + $0x20] sm:$0xff] %vm930, %v902
      %936 = vst.msk [vmem:[%s2 + $0x28] sm:$0xff] %vm930, %v903
      %937 = vst.msk [vmem:[%s2 + $0x30] sm:$0xff] %vm930, %v904
      %938 = vst.msk [vmem:[%s2 + $0x38] sm:$0xff] %vm930, %v905
      %939 = vst.msk [vmem:[%s2 + $0x40] sm:$0xff] %vm930, %v906
      %940 = vst.msk [vmem:[%s2 + $0x48] sm:$0xff] %vm930, %v907
      %941 = vst.msk [vmem:[%s2 + $0x50] sm:$0xff] %vm930, %v908
      %942 = vst.msk [vmem:[%s2 + $0x58] sm:$0xff] %vm930, %v909
      %943 = vst.msk [vmem:[%s2 + $0x60] sm:$0xff] %vm930, %v910
      %944 = vst.msk [vmem:[%s2 + $0x68] sm:$0xff] %vm930, %v911
      %945 = vst.msk [vmem:[%s2 + $0x70] sm:$0xff] %vm930, %v912
      %946 = vst.msk [vmem:[%s2 + $0x78] sm:$0xff] %vm930, %v913
      %947 = vst.msk [vmem:[%s2 + $0x80] sm:$0xff] %vm930, %v914
      %948 = vst.msk [vmem:[%s2 + $0x88] sm:$0xff] %vm930, %v915
      %949 = vst.msk [vmem:[%s2 + $0x90] sm:$0xff] %vm930, %v916
      %950 = vst.msk [vmem:[%s2 + $0x98] sm:$0xff] %vm930, %v917
      %951 = vst.msk [vmem:[%s2 + $0xa0] sm:$0xff] %vm930, %v918
      %952 = vst.msk [vmem:[%s2 + $0xa8] sm:$0xff] %vm930, %v919
      %953 = vst.msk [vmem:[%s2 + $0xb0] sm:$0xff] %vm930, %v920
      %954 = vst.msk [vmem:[%s2 + $0xb8] sm:$0xff] %vm930, %v921
      %955 = vst.msk [vmem:[%s2 + $0xc0] sm:$0xff] %vm930, %v922
      %956 = vst.msk [vmem:[%s2 + $0xc8] sm:$0xff] %vm930, %v923
      %957 = vst.msk [vmem:[%s2 + $0xd0] sm:$0xff] %vm930, %v924
      %958 = vst.msk [vmem:[%s2 + $0xd8] sm:$0xff] %vm930, %v925
      %959 = vst.msk [vmem:[%s2 + $0xe0] sm:$0xff] %vm930, %v926
      %960 = vst.msk [vmem:[%s2 + $0xe8] sm:$0xff] %vm930, %v927
      %961 = vst.msk [vmem:[%s2 + $0xf0] sm:$0xff] %vm930, %v928
      %962 = vst.msk [vmem:[%s2 + $0xf8] sm:$0xff] %vm930, %v929
    $region17: #{tpu_custom_call.1} parent=1 // pred_fallthru
      _
    // Predicated region
    $region18: #{tpu_custom_call.1} parent=1 // pred_check
      _
    $region19: #{tpu_custom_call.1} parent=1 // pred_check_branch
      %964 = sbr.rel (0) target = $region21
    $region20: #{tpu_custom_call.1} parent=1 // pred_region
      %s966 = ssub.s32 4096, 4096
      %967 = vsyncadd [#allocation4], %s966
      %s968 = sshll.u32 [#allocation5], 4
      %s969 = int_to_ptr.vmem [resolvable:$true] %s968
      %974 = dma.vmem_to_hbm [thread:$0]  %s969, 4096, %s1, [#allocation4], 128, 128, 8
    $region21: #{tpu_custom_call.1} parent=1 // pred_fallthru
      _
    // Predicated region
    $region22: #{tpu_custom_call.1} parent=1 // pred_check
      _
    $region23: #{tpu_custom_call.1} parent=1 // pred_check_branch
      %976 = sbr.rel (0) target = $region25
    $region24: #{tpu_custom_call.1} parent=1 // pred_region
      _
    $region25: #{tpu_custom_call.1} parent=1 // pred_fallthru
      _
    // Predicated region
    $region26: #{tpu_custom_call.1} parent=1 // pred_check
      _
    $region27: #{tpu_custom_call.1} parent=1 // pred_check_branch
      %978 = sbr.rel (0) target = $region29
    $region28: #{tpu_custom_call.1} parent=1 // pred_region
      %979 = dma.done [#allocation4], 4096
    $region29: #{tpu_custom_call.1} parent=1 // pred_fallthru
      _
    // Predicated region
    $region30: #{tpu_custom_call.1} parent=1 // pred_check
      _
    $region31: #{tpu_custom_call.1} parent=1 // pred_check_branch
      %981 = sbr.rel (0) target = $region33
    $region32: #{tpu_custom_call.1} parent=1 // pred_region
      _
    $region33: #{tpu_custom_call.1} parent=1 // pred_fallthru
      _
    %982 = vsyncpa [#allocation3], 1
    %983 = vsyncpa [#allocation4], 1

</llo_original>
